<compile_context>
chip_gen: v6e
topology: v6e:2x2x1
jax: 0.10.0
libtpu: 0.0.40
codegen_flags: <defaults>
</compile_context>

<pallas_src>
import jax
import jax.numpy as jnp
from jax.experimental import pallas as pl
from jax.experimental.pallas import tpu as pltpu

LANE = 128
SUBLANE = 8


def _round_up(x, m):
    return (x + m - 1) // m * m


# ----------------------------- Pallas kernel --------------------------------
def gcn_layer_kernel(a_ref, x_ref, w_ref, b_ref, o_ref, acc_ref):
    """One grid step of relu((A @ X) @ W + b): accumulate A_tile @ X_tile over the
    node-contraction axis, apply the small (C, H) matmul + bias + ReLU at the last step."""
    k = pl.program_id(1)

    @pl.when(k == 0)
    def _():
        acc_ref[...] = jnp.zeros_like(acc_ref)

    # (TM, TK) @ (TK, C) -> f32 accumulator (TM, C). MXU, f32 accumulation.
    acc_ref[...] += jnp.dot(a_ref[...], x_ref[...], preferred_element_type=jnp.float32)

    @pl.when(k == pl.num_programs(1) - 1)
    def _():
        # Small (TM, C) @ (C, H_pad) matmul, bias add and ReLU stay in f32
        # (v5e VPU has no bf16 elementwise); cast only on the store.
        h = jnp.dot(acc_ref[...], w_ref[...], preferred_element_type=jnp.float32) + b_ref[...]
        o_ref[...] = jnp.maximum(h, 0.0).astype(o_ref.dtype)


# ----------------------------- Tiling helpers --------------------------------
def _pick_tiles(n, tm=None, tk=None):
    """Choose (tm, tk, n_pad). Defaults keep the MXU M dimension full (TM=512) and the
    contraction tile large (TK=1024) while the K-tiled VMEM footprint stays ~4 MiB."""
    n8 = _round_up(max(n, SUBLANE), SUBLANE)
    tm = 512 if tm is None else _round_up(tm, SUBLANE)
    tk = 1024 if tk is None else _round_up(tk, SUBLANE)
    if n8 <= tm:                       # tiny graph: single block in both dims
        return n8, n8, n8
    n_pad = _round_up(n8, tm)
    if n_pad <= tk:                    # single contraction block
        return tm, n_pad, n_pad
    tk = _round_up(tk, tm)             # make tm | tk | n_pad so the grid divides evenly
    n_pad = _round_up(n_pad, tk)
    return tm, tk, n_pad


def _vmem_bytes_estimate(tm, tk, c, h_pad, a_item, x_item, out_item):
    """Over-estimate of the per-call VMEM footprint (double-buffered pipelined operands,
    resident accumulator, finalize intermediate). Lane-rounds narrow feature dims."""
    c_l = _round_up(c, LANE)
    a = 2 * tm * tk * a_item
    x = 2 * tk * c_l * x_item
    w = 2 * c_l * h_pad * 4
    b = 2 * SUBLANE * h_pad * 4
    out = 2 * tm * h_pad * out_item
    acc = tm * c_l * 4
    fin = tm * h_pad * 4
    return a + x + w + b + out + acc + fin


# ----------------------------- Layer wrapper ---------------------------------
def gcn_layer_pallas(a_pad, x_pad, w_pad, b_pad, tm, tk, *, out_dtype=jnp.float32):
    """relu((a_pad @ x_pad) @ w_pad + b_pad). All inputs already padded:
    a_pad (n_pad, n_pad), x_pad (n_pad, C), w_pad (C, H_pad), b_pad (1, H_pad)."""
    n_pad = a_pad.shape[0]
    c = x_pad.shape[1]
    h_pad = w_pad.shape[1]
    assert n_pad % tm == 0 and n_pad % tk == 0

    est = _vmem_bytes_estimate(
        tm, tk, c, h_pad,
        a_pad.dtype.itemsize, x_pad.dtype.itemsize, jnp.dtype(out_dtype).itemsize,
    )
    # Never below any chip's scoped default (32 MiB), never above v7x-safe 48 MiB.
    vmem_limit = int(min(48 << 20, max(32 << 20, 2 * est)))

    grid = (n_pad // tm, n_pad // tk)
    return pl.pallas_call(
        gcn_layer_kernel,
        out_shape=jax.ShapeDtypeStruct((n_pad, h_pad), out_dtype),
        grid_spec=pltpu.PrefetchScalarGridSpec(
            num_scalar_prefetch=0,
            grid=grid,
            in_specs=[
                pl.BlockSpec((tm, tk), lambda i, k: (i, k)),    # A_hat tile
                pl.BlockSpec((tk, c), lambda i, k: (k, 0)),     # X / h1 contraction tile
                pl.BlockSpec((c, h_pad), lambda i, k: (0, 0)),  # W (lane-padded)
                pl.BlockSpec((1, h_pad), lambda i, k: (0, 0)),  # bias
            ],
            out_specs=pl.BlockSpec((tm, h_pad), lambda i, k: (i, 0)),
            scratch_shapes=[pltpu.VMEM((tm, c), jnp.float32)],  # f32 accumulator
        ),
        compiler_params=pltpu.CompilerParams(
            dimension_semantics=("parallel", "arbitrary"),  # rows across TCs, K is a reduction
            vmem_limit_bytes=vmem_limit,
        ),
    )(a_pad, x_pad, w_pad, b_pad)


# ------------------------------ Full module ----------------------------------
def build_gcn_norm_adj(edge_index, num_nodes, *, n_pad=None, dtype=jnp.float32):
    """Dense D^{-1/2}(A + I)D^{-1/2} from a (2, E) int edge_index (unit weights),
    scattered directly into an (n_pad, n_pad) zero array (built pre-padded: no
    separate N^2 pad pass). Padded rows/columns stay exactly zero."""
    if n_pad is None:
        n_pad = num_nodes
    row, col = edge_index[0], edge_index[1]
    loops = jnp.arange(num_nodes, dtype=edge_index.dtype)
    row = jnp.concatenate([row, loops])
    col = jnp.concatenate([col, loops])
    w = jnp.ones(row.shape[0], dtype=jnp.float32)

    deg = jnp.zeros((num_nodes,), jnp.float32).at[col].add(w)
    dinv = jnp.where(deg > 0, jax.lax.rsqrt(deg), 0.0)
    norm = dinv[row] * w * dinv[col]

    a_hat = jnp.zeros((n_pad, n_pad), jnp.float32).at[row, col].add(norm)
    return a_hat.astype(dtype)


def tspe_pallas(edge_index, x, w1, b1, w2, b2, *, a_dtype=jnp.bfloat16, tm=None, tk=None):
    """Two GCNConv+ReLU layers. Returns (N, hidden_channels) float32."""
    n, c_in = x.shape
    h = w1.shape[1]
    h_pad = _round_up(max(h, LANE), LANE)
    tm, tk, n_pad = _pick_tiles(n, tm, tk)

    # A_hat built pre-padded, cast once, reused by BOTH layers.
    a_pad = build_gcn_norm_adj(edge_index, n, n_pad=n_pad, dtype=a_dtype)
    x_pad = jnp.zeros((n_pad, c_in), a_dtype).at[:n, :].set(x.astype(a_dtype))

    # Lane-dense zero-padded weights/biases (padded columns are zero -> padded h1
    # feature columns are relu(0)=0 and padded W2 rows contribute nothing).
    w1_p = jnp.zeros((c_in, h_pad), jnp.float32).at[:, :h].set(w1)
    b1_p = jnp.zeros((1, h_pad), jnp.float32).at[:, :h].set(jnp.reshape(b1, (1, h)))
    w2_p = jnp.zeros((h_pad, h_pad), jnp.float32).at[:h, :h].set(w2)
    b2_p = jnp.zeros((1, h_pad), jnp.float32).at[:, :h].set(jnp.reshape(b2, (1, h)))

    # Layer 1 emits h1 directly in a_dtype, still padded -> no inter-layer pad/cast pass.
    h1 = gcn_layer_pallas(a_pad, x_pad, w1_p, b1_p, tm, tk, out_dtype=a_dtype)   # (n_pad, h_pad)
    h2 = gcn_layer_pallas(a_pad, h1, w2_p, b2_p, tm, tk, out_dtype=jnp.float32)  # (n_pad, h_pad)
    return h2[:n, :h]


# ------------------------------ JAX reference ---------------------------------
def reference_tspe(a_hat, x, w1, b1, w2, b2):
    h1 = jax.nn.relu(a_hat @ (x @ w1) + b1)
    h2 = jax.nn.relu(a_hat @ (h1 @ w2) + b2)
    return h2


# --------------------------------- Demo ---------------------------------------
if __name__ == "__main__":
    # Small shapes consistent with the module's forward:
    #   data.x : (num_nodes, in_channels), data.edge_index : (2, num_edges)
    num_nodes = 16
    in_channels = 4
    hidden_channels = 32

    key = jax.random.PRNGKey(0)
    k_x, k_w1, k_b1, k_w2, k_b2 = jax.random.split(key, 5)

    x = jax.random.normal(k_x, (num_nodes, in_channels), dtype=jnp.float32)

    # Deterministic undirected graph: ring plus two chords (no duplicated edges).
    src = jnp.arange(num_nodes, dtype=jnp.int32)
    dst = (src + 1) % num_nodes
    chord_src = jnp.arange(0, num_nodes // 2, 4, dtype=jnp.int32)   # [0, 4]
    chord_dst = chord_src + num_nodes // 2                           # [8, 12]
    row = jnp.concatenate([src, chord_src])
    col = jnp.concatenate([dst, chord_dst])
    edge_index = jnp.stack(
        [jnp.concatenate([row, col]), jnp.concatenate([col, row])], axis=0
    )

    # Deterministic parameter init (mimics GCNConv's W (in,out) + bias (out,)).
    w1 = jax.random.normal(k_w1, (in_channels, hidden_channels), jnp.float32) * 0.1
    b1 = jax.random.normal(k_b1, (hidden_channels,), jnp.float32) * 0.1
    w2 = jax.random.normal(k_w2, (hidden_channels, hidden_channels), jnp.float32) * 0.1
    b2 = jax.random.normal(k_b2, (hidden_channels,), jnp.float32) * 0.1

    # Pure-JAX f32 reference.
    a_hat_f32 = build_gcn_norm_adj(edge_index, num_nodes)  # (N, N), unpadded, f32
    ref = reference_tspe(a_hat_f32, x, w1, b1.reshape(1, -1), w2, b2.reshape(1, -1))

    # Default perf path: bf16 A_hat / X / h1, f32 accumulation (loosened tolerance).
    out = tspe_pallas(edge_index, x, w1, b1, w2, b2)
    out = jax.block_until_ready(out)
    assert out.shape == (num_nodes, hidden_channels)
    assert jnp.allclose(out, ref, atol=3e-2, rtol=3e-2), "bf16 Pallas kernel mismatch vs reference"

    # f32 path: tight tolerance against the reference.
    out32 = tspe_pallas(edge_index, x, w1, b1, w2, b2, a_dtype=jnp.float32)
    out32 = jax.block_until_ready(out32)
    assert jnp.allclose(out32, ref, atol=1e-5, rtol=1e-5), "f32 Pallas kernel mismatch vs reference"

    print("KERNEL_OK")
</pallas_src>

<mosaic_0001>
module attributes {stable_mosaic.version = 11 : i64} {
  func.func @gcn_layer_kernel(%arg0: i32, %arg1: i32, %arg2: memref<16x16xbf16, #tpu.memory_space<vmem>>, %arg3: memref<16x4xbf16, #tpu.memory_space<vmem>>, %arg4: memref<4x128xf32, #tpu.memory_space<vmem>>, %arg5: memref<1x128xf32, #tpu.memory_space<vmem>>, %arg6: memref<16x128xbf16, #tpu.memory_space<vmem>>, %arg7: memref<16x4xf32, #tpu.memory_space<vmem>>) attributes {dimension_semantics = [#tpu.dimension_semantics<parallel>, #tpu.dimension_semantics<arbitrary>], iteration_bounds = array<i64: 1, 1>, scalar_prefetch = 0 : i64, scratch_operands = 1 : i64, tpu.core_type = #tpu.core_type<tc>, window_params = [{transform_indices = @transform_0, window_bounds = array<i64: 16, 16>}, {transform_indices = @transform_1, window_bounds = array<i64: 16, 4>}, {pipeline_mode = #tpu.pipeline_mode<synchronous>, transform_indices = @transform_2, window_bounds = array<i64: 4, 128>}, {pipeline_mode = #tpu.pipeline_mode<synchronous>, transform_indices = @transform_3, window_bounds = array<i64: 1, 128>}, {transform_indices = @transform_4, window_bounds = array<i64: 16, 128>}]} {
    %c0_i32 = arith.constant 0 : i32
    %0 = arith.cmpi eq, %arg1, %c0_i32 : i32
    %1 = arith.extui %0 : i1 to i32
    %c0_i32_0 = arith.constant 0 : i32
    %2 = arith.cmpi ne, %1, %c0_i32_0 : i32
    scf.if %2 {
      %cst_10 = arith.constant 0.000000e+00 : f32
      %12 = vector.broadcast %cst_10 : f32 to vector<16x4xf32>
      %c0_11 = arith.constant 0 : index
      %c0_12 = arith.constant 0 : index
      %13 = vector.load %arg7[%c0_11, %c0_12] : memref<16x4xf32, #tpu.memory_space<vmem>>, vector<16x4xf32>
      tpu.vector_store %arg7[%c0_11, %c0_12], %12 {strides = array<i32>} : memref<16x4xf32, #tpu.memory_space<vmem>>, vector<16x4xf32>,
    } else {
    }
    %c0 = arith.constant 0 : index
    %c0_1 = arith.constant 0 : index
    %3 = vector.load %arg7[%c0, %c0_1] : memref<16x4xf32, #tpu.memory_space<vmem>>, vector<16x4xf32>
    %c0_2 = arith.constant 0 : index
    %c0_3 = arith.constant 0 : index
    %4 = vector.load %arg2[%c0_2, %c0_3] : memref<16x16xbf16, #tpu.memory_space<vmem>>, vector<16x16xbf16>
    %c0_4 = arith.constant 0 : index
    %c0_5 = arith.constant 0 : index
    %5 = vector.load %arg3[%c0_4, %c0_5] : memref<16x4xbf16, #tpu.memory_space<vmem>>, vector<16x4xbf16>
    %cst = arith.constant dense<0.000000e+00> : vector<16x4xf32>
    %6 = tpu.matmul %4, %5, %cst {dimension_numbers = #tpu.dot_dimension_numbers<[1], [0], [0], [1], [0, 0, 1, 1], [], []>} : vector<16x16xbf16>, vector<16x4xbf16>, vector<16x4xf32> -> vector<16x4xf32>
    %7 = arith.addf %3, %6 : vector<16x4xf32>
    %c0_6 = arith.constant 0 : index
    %c0_7 = arith.constant 0 : index
    %8 = vector.load %arg7[%c0_6, %c0_7] : memref<16x4xf32, #tpu.memory_space<vmem>>, vector<16x4xf32>
    tpu.vector_store %arg7[%c0_6, %c0_7], %7 {strides = array<i32>} : memref<16x4xf32, #tpu.memory_space<vmem>>, vector<16x4xf32>,
    %c0_i32_8 = arith.constant 0 : i32
    %9 = arith.cmpi eq, %arg1, %c0_i32_8 : i32
    %10 = arith.extui %9 : i1 to i32
    %c0_i32_9 = arith.constant 0 : i32
    %11 = arith.cmpi ne, %10, %c0_i32_9 : i32
    scf.if %11 {
      %c0_10 = arith.constant 0 : index
      %c0_11 = arith.constant 0 : index
      %12 = vector.load %arg7[%c0_10, %c0_11] : memref<16x4xf32, #tpu.memory_space<vmem>>, vector<16x4xf32>
      %c0_12 = arith.constant 0 : index
      %c0_13 = arith.constant 0 : index
      %13 = vector.load %arg4[%c0_12, %c0_13] : memref<4x128xf32, #tpu.memory_space<vmem>>, vector<4x128xf32>
      %cst_14 = arith.constant dense<0.000000e+00> : vector<16x128xf32>
      %14 = tpu.matmul %12, %13, %cst_14 {dimension_numbers = #tpu.dot_dimension_numbers<[1], [0], [0], [1], [0, 0, 1, 1], [], []>} : vector<16x4xf32>, vector<4x128xf32>, vector<16x128xf32> -> vector<16x128xf32>
      %c0_15 = arith.constant 0 : index
      %c0_16 = arith.constant 0 : index
      %15 = vector.load %arg5[%c0_15, %c0_16] : memref<1x128xf32, #tpu.memory_space<vmem>>, vector<1x128xf32>
      %16 = vector.broadcast %15 : vector<1x128xf32> to vector<16x128xf32>
      %17 = arith.addf %14, %16 : vector<16x128xf32>
      %cst_17 = arith.constant 0.000000e+00 : f32
      %18 = vector.broadcast %cst_17 : f32 to vector<16x128xf32>
      %19 = arith.maximumf %17, %18 : vector<16x128xf32>
      %20 = arith.truncf %19 : vector<16x128xf32> to vector<16x128xbf16>
      %c0_18 = arith.constant 0 : index
      %c0_19 = arith.constant 0 : index
      %21 = vector.load %arg6[%c0_18, %c0_19] : memref<16x128xbf16, #tpu.memory_space<vmem>>, vector<16x128xbf16>
      tpu.vector_store %arg6[%c0_18, %c0_19], %20 {strides = array<i32>} : memref<16x128xbf16, #tpu.memory_space<vmem>>, vector<16x128xbf16>,
    } else {
    }
    return
  }
  func.func @transform_0(%arg0: i32, %arg1: i32) -> (i32, i32) {
    %c0_i32 = arith.constant 0 : i32
    return %arg0, %arg1 : i32, i32
  }
  func.func @transform_1(%arg0: i32, %arg1: i32) -> (i32, i32) {
    %c0_i32 = arith.constant 0 : i32
    %c0_i32_0 = arith.constant 0 : i32
    return %arg1, %c0_i32 : i32, i32
  }
  func.func @transform_2(%arg0: i32, %arg1: i32) -> (i32, i32) {
    %c0_i32 = arith.constant 0 : i32
    %c0_i32_0 = arith.constant 0 : i32
    %c0_i32_1 = arith.constant 0 : i32
    return %c0_i32, %c0_i32_0 : i32, i32
  }
  func.func @transform_3(%arg0: i32, %arg1: i32) -> (i32, i32) {
    %c0_i32 = arith.constant 0 : i32
    %c0_i32_0 = arith.constant 0 : i32
    %c0_i32_1 = arith.constant 0 : i32
    return %c0_i32, %c0_i32_0 : i32, i32
  }
  func.func @transform_4(%arg0: i32, %arg1: i32) -> (i32, i32) {
    %c0_i32 = arith.constant 0 : i32
    %c0_i32_0 = arith.constant 0 : i32
    return %arg0, %c0_i32 : i32, i32
  }
}

</mosaic_0001>

<llo_original>
// kernel: tpu_custom_call.1
$region0: #{tpu_custom_call.1}
  #allocation0 [shape = 'u32[]', space=smem, size = 0x4, offset = 0x4, fixed_abs, tag = 'smem constant byte address 0x4 - core index']
  #allocation1 [shape = 'u32[144,128]{1,0:T(1,128)}', space=vmem, size = 0x12000, scoped, tag = 'internal scratch']
  #allocation2 [shape = 'f32[16,4]{1,0:T(8,128)}', space=vmem, size = 0x2000, scoped, tag = 'scratch operand']
  %s0 = inlined_call_operand.vmem [shape: bf16[16,16], index: 0, kind: input, shape index: {}]
  %s1 = inlined_call_operand.vmem [shape: bf16[16,4], index: 1, kind: input, shape index: {}]
  %s2 = inlined_call_operand.vmem [shape: f32[4,128], index: 2, kind: input, shape index: {}]
  %s3 = inlined_call_operand.vmem [shape: f32[1,128], index: 3, kind: input, shape index: {}]
  %s4 = inlined_call_operand.hbm [shape: bf16[16,128], index: 4, kind: output, shape index: {}]
  %s5 = sld [smem:[#allocation0]]
  $region34: #{tpu_custom_call.1} parent=0
    _
  %s7 = ssub.s32 1, %s5
  %s8 = scalar_select 0, %s7, %s5
  $region1: #{tpu_custom_call.1} parent=0
    #allocation3 [shape = 'u8[4096]{0}', space=vmem, size = 0x1000, scoped, tag = 'output window, operand 0, single buffered']
    #allocation4 [shape = 's32[1]{0}', space=sflag, size = 0x4, scoped, tag = 'scoped memory for tpu_custom_call.1']
    %9 = vsyncpa [#allocation4], 0
    // Predicated region
    $region2: #{tpu_custom_call.1} parent=1 // pred_check
      _
    $region3: #{tpu_custom_call.1} parent=1 // pred_check_branch
      %11 = sbr.rel (0) target = $region5
    $region4: #{tpu_custom_call.1} parent=1 // pred_region
      _
    $region5: #{tpu_custom_call.1} parent=1 // pred_fallthru
      _
    // Predicated region
    $region6: #{tpu_custom_call.1} parent=1 // pred_check
      _
    $region7: #{tpu_custom_call.1} parent=1 // pred_check_branch
      %13 = sbr.rel (0) target = $region9
    $region8: #{tpu_custom_call.1} parent=1 // pred_region
      _
    $region9: #{tpu_custom_call.1} parent=1 // pred_fallthru
      _
    // Predicated region
    $region10: #{tpu_custom_call.1} parent=1 // pred_check
      _
    $region11: #{tpu_custom_call.1} parent=1 // pred_check_branch
      %15 = sbr.rel (0) target = $region13
    $region12: #{tpu_custom_call.1} parent=1 // pred_region
      _
    $region13: #{tpu_custom_call.1} parent=1 // pred_fallthru
      _
    // Predicated region
    $region14: #{tpu_custom_call.1} parent=1 // pred_check
      _
    $region15: #{tpu_custom_call.1} parent=1 // pred_check_branch
      %17 = sbr.rel (0) target = $region17
    $region16: #{tpu_custom_call.1} parent=1 // pred_region
      _
    $region17: #{tpu_custom_call.1} parent=1 // pred_fallthru
      _
    %p19 = scmp.eq.s32.totalorder 0, 0
    // Predicated region
    $region18: #{tpu_custom_call.1} parent=1 // pred_check
      %p20 = pneg %p19
    $region19: #{tpu_custom_call.1} parent=1 // pred_check_branch
      %22 = sbr.rel (%p20) target = $region21
    $region20: #{tpu_custom_call.1} parent=1 // pred_region
      %vm23 = vcmask 31744
      %24 = vst.msk [vmem:[#allocation2] sm:$0xff] %vm23, 0.0
      %25 = vst.msk [vmem:[#allocation2 + $0x8] sm:$0xff] %vm23, 0.0
    $region21: #{tpu_custom_call.1} parent=1 // pred_fallthru
      _
    %v26 = vld [vmem:[#allocation2] sm:$0xff]
    %v27 = vld [vmem:[#allocation2 + $0x8] sm:$0xff]
    %v28 = vld [vmem:[%s0] sm:$0xf]
    %v29 = vld [vmem:[%s0 + $0x4] sm:$0xf]
    %v30 = vld [vmem:[%s1] sm:$0xf]
    %v31 = vld [vmem:[%s1 + $0x4] sm:$0xf]
    %v34 = vunpack.c.l.b16 %v28
    %v35 = vunpack.c.l.b16 %v29
    %v36 = vpack.c.b16 %v35, %v34
    %v39 = vunpack.c.l.b16 %v30
    %v40 = vunpack.c.l.b16 %v31
    %v41 = vpack.c.b16 %v40, %v39
    %vm43 = vcmask 130048
    %v45 = vsel %vm43, %v36, 0
    %47 = vmatprep.subr.bf16.mxu0 0
    %48 = vmatpush1.bf16.msra.mxu0 0
    %49 = vmatprep.subr.bf16.mxu0 0
    %50 = vmatpush1.bf16.msra.mxu0 0
    %51 = vmatprep.subr.bf16.mxu0 0
    %52 = vmatpush1.bf16.msra.mxu0 0
    %53 = vmatprep.subr.bf16.mxu0 0
    %54 = vmatpush1.bf16.msra.mxu0 0
    %55 = vmatprep.subr.bf16.mxu0 0
    %56 = vmatpush1.bf16.msra.mxu0 0
    %57 = vmatprep.subr.bf16.mxu0 0
    %58 = vmatpush1.bf16.msra.mxu0 0
    %59 = vmatprep.subr.bf16.mxu0 0
    %60 = vmatpush1.bf16.msra.mxu0 0
    %61 = vmatprep.subr.bf16.mxu0 0
    %62 = vmatpush1.bf16.msra.mxu0 %v41
    %63 = vmatprep.subr.bf16.mxu0 0
    %64 = vmatpush2.bf16.msra.mxu0 0
    %65 = vmatprep.subr.bf16.mxu0 0
    %66 = vmatpush2.bf16.msra.mxu0 0
    %67 = vmatprep.subr.bf16.mxu0 0
    %68 = vmatpush2.bf16.msra.mxu0 0
    %69 = vmatprep.subr.bf16.mxu0 0
    %70 = vmatpush2.bf16.msra.mxu0 0
    %71 = vmatprep.subr.bf16.mxu0 0
    %72 = vmatpush2.bf16.msra.mxu0 0
    %73 = vmatprep.subr.bf16.mxu0 0
    %74 = vmatpush2.bf16.msra.mxu0 0
    %75 = vmatprep.subr.bf16.mxu0 0
    %76 = vmatpush2.bf16.msra.mxu0 0
    %77 = vmatprep.subr.bf16.mxu0 0
    %78 = vmatpush2.bf16.msra.mxu0 0
    %79 = vmatprep.mubr.bf16.mxu0 0
    %80 = vmatmul.mubr.bf16.gmra.mxu0 %v45
    %v81 = vpop.f32.mrf.mxu0
    %v82 = vadd.f32 0.0, %v81
    %v83 = vpop.f32.mrf.mxu0
    %v84 = vpop.f32.mrf.mxu0
    %v85 = vadd.f32 0.0, %v84
    %v86 = vpop.f32.mrf.mxu0
    %87 = vdwg.mxu0
    %v88 = vadd.f32 %v26, %v82
    %v89 = vadd.f32 %v27, %v85
    %vm90 = vcmask 31744
    %91 = vst.msk [vmem:[#allocation2] sm:$0xff] %vm90, %v88
    %92 = vst.msk [vmem:[#allocation2 + $0x8] sm:$0xff] %vm90, %v89
    // Predicated region
    $region22: #{tpu_custom_call.1} parent=1 // pred_check
      %p93 = pneg %p19
    $region23: #{tpu_custom_call.1} parent=1 // pred_check_branch
      %95 = sbr.rel (%p93) target = $region25
    $region24: #{tpu_custom_call.1} parent=1 // pred_region
      %v96 = vld [vmem:[#allocation2] sm:$0xff]
      %v97 = vld [vmem:[#allocation2 + $0x8] sm:$0xff]
      %v98 = vld [vmem:[%s2] sm:$0xf]
      %v99 = vld [vmem:[%s3] sm:$0x1]
      %v101 = vlaneseq
      %v102 = vshrl.u32 %v101, 7
      %v103 = vsub.s32 0, %v102
      %v104 = vrot.slane %v99, %v103
      %v107 = vsel %vm90, %v96, 0
      %v110 = vsel %vm90, %v97, 0
      %vm112 = vcmask 1043456
      %v114 = vsel %vm112, %v98, 0
      %116 = vmatprep.subr.mxu0 0.0
      %117 = vmatpush1.msra.mxu0 0.0
      %118 = vmatprep.subr.mxu0 0.0
      %119 = vmatpush1.msra.mxu0 0.0
      %120 = vmatprep.subr.mxu0 0.0
      %121 = vmatpush1.msra.mxu0 0.0
      %122 = vmatprep.subr.mxu0 0.0
      %123 = vmatpush1.msra.mxu0 0.0
      %124 = vmatprep.subr.mxu0 0.0
      %125 = vmatpush1.msra.mxu0 0.0
      %126 = vmatprep.subr.mxu0 0.0
      %127 = vmatpush1.msra.mxu0 0.0
      %128 = vmatprep.subr.mxu0 0.0
      %129 = vmatpush1.msra.mxu0 0.0
      %130 = vmatprep.subr.mxu0 0.0
      %131 = vmatpush1.msra.mxu0 0.0
      %132 = vmatprep.subr.mxu0 0.0
      %133 = vmatpush1.msra.mxu0 0.0
      %134 = vmatprep.subr.mxu0 0.0
      %135 = vmatpush1.msra.mxu0 0.0
      %136 = vmatprep.subr.mxu0 0.0
      %137 = vmatpush1.msra.mxu0 0.0
      %138 = vmatprep.subr.mxu0 0.0
      %139 = vmatpush1.msra.mxu0 0.0
      %140 = vmatprep.subr.mxu0 0.0
      %141 = vmatpush1.msra.mxu0 0.0
      %142 = vmatprep.subr.mxu0 0.0
      %143 = vmatpush1.msra.mxu0 0.0
      %144 = vmatprep.subr.mxu0 0.0
      %145 = vmatpush1.msra.mxu0 0.0
      %146 = vmatprep.subr.mxu0 0.0
      %147 = vmatpush1.msra.mxu0 %v114
      %148 = vmatprep.subr.mxu0 0.0
      %149 = vmatpush2.msra.mxu0 0.0
      %150 = vmatprep.subr.mxu0 0.0
      %151 = vmatpush2.msra.mxu0 0.0
      %152 = vmatprep.subr.mxu0 0.0
      %153 = vmatpush2.msra.mxu0 0.0
      %154 = vmatprep.subr.mxu0 0.0
      %155 = vmatpush2.msra.mxu0 0.0
      %156 = vmatprep.subr.mxu0 0.0
      %157 = vmatpush2.msra.mxu0 0.0
      %158 = vmatprep.subr.mxu0 0.0
      %159 = vmatpush2.msra.mxu0 0.0
      %160 = vmatprep.subr.mxu0 0.0
      %161 = vmatpush2.msra.mxu0 0.0
      %162 = vmatprep.subr.mxu0 0.0
      %163 = vmatpush2.msra.mxu0 0.0
      %164 = vmatprep.subr.mxu0 0.0
      %165 = vmatpush2.msra.mxu0 0.0
      %166 = vmatprep.subr.mxu0 0.0
      %167 = vmatpush2.msra.mxu0 0.0
      %168 = vmatprep.subr.mxu0 0.0
      %169 = vmatpush2.msra.mxu0 0.0
      %170 = vmatprep.subr.mxu0 0.0
      %171 = vmatpush2.msra.mxu0 0.0
      %172 = vmatprep.subr.mxu0 0.0
      %173 = vmatpush2.msra.mxu0 0.0
      %174 = vmatprep.subr.mxu0 0.0
      %175 = vmatpush2.msra.mxu0 0.0
      %176 = vmatprep.subr.mxu0 0.0
      %177 = vmatpush2.msra.mxu0 0.0
      %178 = vmatprep.subr.mxu0 0.0
      %179 = vmatpush2.msra.mxu0 0.0
      %180 = vmatprep.mubr.f32.mxu0 0.0
      %181 = vmatmul.mubr.f32.gmra.mxu0 %v107
      %v182 = vpop.f32.mrf.mxu0
      %v183 = vadd.f32 %v104, %v182
      %v184 = vpop.f32.mrf.mxu0
      %185 = vmatprep.mubr.f32.mxu0 0.0
      %186 = vmatmul.mubr.f32.gmra.mxu0 %v110
      %v187 = vpop.f32.mrf.mxu0
      %v188 = vadd.f32 %v104, %v187
      %v189 = vpop.f32.mrf.mxu0
      %190 = vdwg.mxu0
      %v191 = vmax.f32 %v183, 0.0
      %v192 = vmax.f32 %v188, 0.0
      %v193 = vpack.c.bf16 %v192, %v191
      %v195 = vunpack.c.l.b16 %v193
      %v196 = vunpack.c.h.b16 %v193
      %v197 = vpack.c.b16 %v195, %v195
      %v198 = vpack.c.b16 %v196, %v196
      %201 = vst [vmem:[#allocation3] sm:$0xf] %v197
      %202 = vst [vmem:[#allocation3 + $0x4] sm:$0xf] %v198
    $region25: #{tpu_custom_call.1} parent=1 // pred_fallthru
      _
    // Predicated region
    $region26: #{tpu_custom_call.1} parent=1 // pred_check
      _
    $region27: #{tpu_custom_call.1} parent=1 // pred_check_branch
      %204 = sbr.rel (0) target = $region29
    $region28: #{tpu_custom_call.1} parent=1 // pred_region
      %s206 = ssub.s32 128, 128
      %207 = vsyncadd [#allocation4], %s206
      %s208 = sshll.u32 [#allocation3], 4
      %s209 = int_to_ptr.vmem [resolvable:$true] %s208
      %214 = dma.vmem_to_hbm [thread:$0]  %s209, 128, %s4, [#allocation4], 64, 64, 4
    $region29: #{tpu_custom_call.1} parent=1 // pred_fallthru
      _
    // Predicated region
    $region30: #{tpu_custom_call.1} parent=1 // pred_check
      _
    $region31: #{tpu_custom_call.1} parent=1 // pred_check_branch
      %216 = sbr.rel (0) target = $region33
    $region32: #{tpu_custom_call.1} parent=1 // pred_region
      %217 = dma.done [#allocation4], 128
    $region33: #{tpu_custom_call.1} parent=1 // pred_fallthru
      _
    %218 = vsyncpa [#allocation4], 1

</llo_original>
